<compile_context>
chip_gen: v6e
topology: v6e:2x2x1
jax: 0.10.0
libtpu: 0.0.40
codegen_flags: <defaults>
</compile_context>

<pallas_src>
import functools
import math

import jax
import jax.numpy as jnp
from jax.experimental import pallas as pl
from jax.experimental.pallas import tpu as pltpu


def _round_up(a, b):
    return (a + b - 1) // b * b


def _cdiv(a, b):
    return (a + b - 1) // b


def _fit_tiles(dim, max_tile, align):
    """Balanced tiling: pick the tile count first, then the smallest aligned
    tile that covers dim.  Returns (tile, n_tiles, padded_dim)."""
    max_tile = _round_up(min(max_tile, _round_up(dim, align)), align)
    n = _cdiv(dim, max_tile)
    tile = _round_up(_cdiv(dim, n), align)
    return tile, n, tile * n


def _vmem_budget_bytes():
    """~75% of physical VMEM; conservative fallback if the query fails
    (e.g. interpret mode on CPU)."""
    try:
        cap = pltpu.get_tpu_info().vmem_capacity_bytes
    except Exception:
        cap = 64 * 2 ** 20
    return int(cap) * 3 // 4


def _linear_kernel(x_ref, w_ref, *rest, nk, has_bias):
    """One (tm, tn) output tile. Grid = (j, i, k); k (reduction) innermost."""
    if has_bias:
        b_ref, o_ref, *scratch = rest
    else:
        o_ref, *scratch = rest

    k = pl.program_id(2)
    contrib = jnp.dot(x_ref[...], w_ref[...], preferred_element_type=jnp.float32)

    if nk == 1:
        # Single K step: no scratch accumulator, write straight to the output.
        out = contrib + b_ref[...] if has_bias else contrib
        o_ref[...] = out.astype(o_ref.dtype)
    else:
        acc_ref = scratch[0]

        @pl.when(k == 0)
        def _():
            acc_ref[...] = contrib

        @pl.when(k > 0)
        def _():
            acc_ref[...] += contrib

        @pl.when(k == nk - 1)
        def _():
            out = acc_ref[...] + b_ref[...] if has_bias else acc_ref[...]
            o_ref[...] = out.astype(o_ref.dtype)


# Below this many MACs the pallas_call plumbing dominates; let XLA fuse it.
_PALLAS_MIN_WORK = 1 << 21


def linear_pallas(x, weight, bias=None, *, dropout=0.0, training=False,
                  seed=0, tm=512, tn=1024, tk=2048,
                  compute_dtype=jnp.bfloat16):
    """Matches torch Linear.forward: dropout(x) @ W (+ bias) over last dim of x.

    compute_dtype: dtype for the MXU operands (default bf16 — native on
    v5e/v6e/v7x; accumulation stays float32 and the output keeps x.dtype).
    Pass None to keep the input dtype.
    """
    in_features, out_features = weight.shape
    assert x.shape[-1] == in_features
    lead = x.shape[:-1]
    M = math.prod(lead) if lead else 1
    K, N = in_features, out_features
    out_dtype = x.dtype
    has_bias = bias is not None

    p = float(dropout)
    apply_dropout = bool(training) and p > 0.0
    if apply_dropout:
        assert 0.0 < p < 1.0, "dropout rate must be in (0, 1)"

    x2d = x.reshape(M, K)
    if apply_dropout:
        # Single elementwise pass; mask depends only on (seed, M, K), not on
        # tiling, so results are reproducible across tile/generation changes.
        keep = jax.random.bernoulli(jax.random.PRNGKey(seed), 1.0 - p, (M, K))
        x2d = jnp.where(keep, x2d * (1.0 / (1.0 - p)),
                        jnp.zeros_like(x2d)).astype(x2d.dtype)

    if compute_dtype is not None:
        x2d = x2d.astype(compute_dtype)
        weight = weight.astype(compute_dtype)

    # ---- tiny-problem fallback: XLA's fused path beats kernel overhead ----
    if M * K * N < _PALLAS_MIN_WORK:
        out = jnp.matmul(x2d, weight, preferred_element_type=jnp.float32)
        if has_bias:
            out = out + bias
        return out.astype(out_dtype).reshape(*lead, N)

    # ---- balanced, MXU/lane-aligned tiles, minimal padding ----
    itemsize = jnp.dtype(x2d.dtype).itemsize
    sublane = 8 * max(1, 4 // itemsize)          # 8 f32 / 16 bf16 / 32 int8
    tm_eff, ni, M_pad = _fit_tiles(M, tm, sublane)
    tk_eff, nk, K_pad = _fit_tiles(K, tk, 128)
    tn_eff, nj, N_pad = _fit_tiles(N, tn, 128)   # lane-dense output stores

    # v7x megacore: make sure the parallel (i, j) grid has >= 2 blocks.
    if ni * nj == 1:
        if tn_eff >= 2 * 128:
            tn_eff = _round_up(_cdiv(N, 2), 128)
            nj, N_pad = 2, 2 * _round_up(_cdiv(N, 2), 128)
        elif tm_eff >= 2 * sublane:
            tm_eff = _round_up(_cdiv(M, 2), sublane)
            ni, M_pad = 2, 2 * _round_up(_cdiv(M, 2), sublane)

    x_p = x2d if (M_pad == M and K_pad == K) else \
        jnp.pad(x2d, ((0, M_pad - M), (0, K_pad - K)))
    w_p = weight if (K_pad == K and N_pad == N) else \
        jnp.pad(weight, ((0, K_pad - K), (0, N_pad - N)))

    grid = (nj, ni, nk)  # j outermost (weight-tile reuse), k innermost (acc)

    in_specs = [
        pl.BlockSpec((tm_eff, tk_eff), lambda j, i, k: (i, k)),
        pl.BlockSpec((tk_eff, tn_eff), lambda j, i, k: (k, j)),
    ]
    inputs = [x_p, w_p]
    if has_bias:
        b_p = jnp.pad(bias.astype(jnp.float32).reshape(1, N),
                      ((0, 0), (0, N_pad - N)))
        in_specs.append(pl.BlockSpec((1, tn_eff), lambda j, i, k: (0, j)))
        inputs.append(b_p)

    scratch = [] if nk == 1 else [pltpu.VMEM((tm_eff, tn_eff), jnp.float32)]

    # VMEM budget: double-buffered x/w/out tiles (+ acc + bias), capped to a
    # generation-aware fraction of physical VMEM (64 MiB on v7x, 128 on v5e/v6e).
    xi = jnp.dtype(x_p.dtype).itemsize
    wi = jnp.dtype(w_p.dtype).itemsize
    oi = jnp.dtype(out_dtype).itemsize
    est = (2 * (tm_eff * tk_eff * xi + tk_eff * tn_eff * wi)
           + 2 * tm_eff * tn_eff * oi
           + (0 if nk == 1 else tm_eff * tn_eff * 4)
           + (2 * tn_eff * 4 if has_bias else 0))
    vmem_limit = int(min(_vmem_budget_bytes(), max(32 * 2 ** 20, 2 * est)))

    kernel = functools.partial(_linear_kernel, nk=nk, has_bias=has_bias)

    out_p = pl.pallas_call(
        kernel,
        out_shape=jax.ShapeDtypeStruct((M_pad, N_pad), out_dtype),
        grid_spec=pltpu.PrefetchScalarGridSpec(
            num_scalar_prefetch=0,
            grid=grid,
            in_specs=in_specs,
            out_specs=pl.BlockSpec((tm_eff, tn_eff), lambda j, i, k: (i, j)),
            scratch_shapes=scratch,
        ),
        compiler_params=pltpu.CompilerParams(
            dimension_semantics=("parallel", "parallel", "arbitrary"),
            vmem_limit_bytes=vmem_limit,
        ),
    )(*inputs)

    out = out_p if (M_pad == M and N_pad == N) else out_p[:M, :N]
    return out.reshape(*lead, N)


def kaiming_uniform_fan_out(key, in_features, out_features, a=math.sqrt(5)):
    """Stand-in for nn.init.kaiming_uniform_(mode='fan_out', a=sqrt(5))."""
    fan_out = out_features
    gain = math.sqrt(2.0 / (1.0 + a * a))
    bound = math.sqrt(3.0) * gain / math.sqrt(fan_out)
    return jax.random.uniform(
        key, (in_features, out_features), jnp.float32, -bound, bound)


if __name__ == "__main__":
    key = jax.random.PRNGKey(0)
    k_x, k_w, k_x2, k_w2, k_b2 = jax.random.split(key, 5)

    # --- test 1: eval mode (dropout identity), aligned shapes, no bias ---
    batch, seq, in_f, out_f = 2, 128, 256, 256
    x = jax.random.normal(k_x, (batch, seq, in_f), jnp.float32)
    w = kaiming_uniform_fan_out(k_w, in_f, out_f)
    out = jax.block_until_ready(linear_pallas(x, w, dropout=0.5, training=False))
    ref = jnp.matmul(x, w, precision=jax.lax.Precision.HIGHEST)
    assert out.shape == (batch, seq, out_f)
    assert jnp.allclose(out, ref, atol=2e-2, rtol=2e-2), \
        float(jnp.max(jnp.abs(out - ref)))

    # --- test 2: non-divisible shapes + fused bias + multi-step K accumulation ---
    b2, s2, in2, out2 = 2, 100, 768, 200
    x2 = jax.random.normal(k_x2, (b2, s2, in2), jnp.float32)
    w2 = kaiming_uniform_fan_out(k_w2, in2, out2)
    bias2 = jax.random.uniform(k_b2, (out2,), jnp.float32, -0.1, 0.1)
    out_2 = jax.block_until_ready(
        linear_pallas(x2, w2, bias2, dropout=0.0, training=False, tk=256))
    ref2 = jnp.matmul(x2, w2, precision=jax.lax.Precision.HIGHEST) + bias2
    assert out_2.shape == (b2, s2, out2)
    assert jnp.allclose(out_2, ref2, atol=2e-2, rtol=2e-2), \
        float(jnp.max(jnp.abs(out_2 - ref2)))

    # --- test 3: training-mode dropout (mask + 1/(1-p) scale), exact mask check ---
    seed = 123
    out_tr = jax.block_until_ready(
        linear_pallas(x, w, dropout=0.5, training=True, seed=seed))
    assert out_tr.shape == (batch, seq, out_f)
    # Reproduce the wrapper's mask derivation and build an f32 reference.
    keep = jax.random.bernoulli(jax.random.PRNGKey(seed), 0.5,
                                (batch * seq, in_f))
    x_drop = jnp.where(keep, x.reshape(batch * seq, in_f) * 2.0, 0.0)
    ref_tr = jnp.matmul(x_drop, w,
                        precision=jax.lax.Precision.HIGHEST
                        ).reshape(batch, seq, out_f)
    assert bool(jnp.all(jnp.isfinite(out_tr)))
    assert jnp.allclose(out_tr, ref_tr, atol=3e-2, rtol=3e-2), \
        float(jnp.max(jnp.abs(out_tr - ref_tr)))

    print("KERNEL_OK")
</pallas_src>

<mosaic_0001>
module attributes {stable_mosaic.version = 11 : i64} {
  func.func @_linear_kernel(%arg0: i32, %arg1: i32, %arg2: i32, %arg3: memref<256x256xbf16, #tpu.memory_space<vmem>>, %arg4: memref<256x128xbf16, #tpu.memory_space<vmem>>, %arg5: memref<256x128xf32, #tpu.memory_space<vmem>>) attributes {dimension_semantics = [#tpu.dimension_semantics<parallel>, #tpu.dimension_semantics<parallel>, #tpu.dimension_semantics<arbitrary>], iteration_bounds = array<i64: 2, 1, 1>, scalar_prefetch = 0 : i64, scratch_operands = 0 : i64, tpu.core_type = #tpu.core_type<tc>, window_params = [{transform_indices = @transform_0, window_bounds = array<i64: 256, 256>}, {transform_indices = @transform_1, window_bounds = array<i64: 256, 128>}, {transform_indices = @transform_2, window_bounds = array<i64: 256, 128>}]} {
    %c0 = arith.constant 0 : index
    %c0_0 = arith.constant 0 : index
    %0 = vector.load %arg3[%c0, %c0_0] : memref<256x256xbf16, #tpu.memory_space<vmem>>, vector<256x256xbf16>
    %c0_1 = arith.constant 0 : index
    %c0_2 = arith.constant 0 : index
    %1 = vector.load %arg4[%c0_1, %c0_2] : memref<256x128xbf16, #tpu.memory_space<vmem>>, vector<256x128xbf16>
    %cst = arith.constant dense<0.000000e+00> : vector<256x128xf32>
    %2 = tpu.matmul %0, %1, %cst {dimension_numbers = #tpu.dot_dimension_numbers<[1], [0], [0], [1], [0, 0, 1, 1], [], []>} : vector<256x256xbf16>, vector<256x128xbf16>, vector<256x128xf32> -> vector<256x128xf32>
    %c0_3 = arith.constant 0 : index
    %c0_4 = arith.constant 0 : index
    %3 = vector.load %arg5[%c0_3, %c0_4] : memref<256x128xf32, #tpu.memory_space<vmem>>, vector<256x128xf32>
    tpu.vector_store %arg5[%c0_3, %c0_4], %2 {strides = array<i32>} : memref<256x128xf32, #tpu.memory_space<vmem>>, vector<256x128xf32>,
    return
  }
  func.func @transform_0(%arg0: i32, %arg1: i32, %arg2: i32) -> (i32, i32) {
    %c0_i32 = arith.constant 0 : i32
    return %arg1, %arg2 : i32, i32
  }
  func.func @transform_1(%arg0: i32, %arg1: i32, %arg2: i32) -> (i32, i32) {
    %c0_i32 = arith.constant 0 : i32
    return %arg2, %arg0 : i32, i32
  }
  func.func @transform_2(%arg0: i32, %arg1: i32, %arg2: i32) -> (i32, i32) {
    %c0_i32 = arith.constant 0 : i32
    return %arg1, %arg0 : i32, i32
  }
}

</mosaic_0001>

<llo_original>
// kernel: tpu_custom_call.1
$region0: #{tpu_custom_call.1}
  #allocation0 [shape = 'u32[]', space=smem, size = 0x4, offset = 0x4, fixed_abs, tag = 'smem constant byte address 0x4 - core index']
  #allocation1 [shape = 'u32[144,128]{1,0:T(1,128)}', space=vmem, size = 0x12000, scoped, tag = 'internal scratch']
  %s0 = inlined_call_operand.hbm [shape: bf16[256,256], index: 0, kind: input, shape index: {}]
  %s1 = inlined_call_operand.hbm [shape: bf16[256,256], index: 1, kind: input, shape index: {}]
  %s2 = inlined_call_operand.hbm [shape: f32[256,256], index: 2, kind: output, shape index: {}]
  %s3 = sld [smem:[#allocation0]]
  $region49: #{tpu_custom_call.1} parent=0
    _
  %s5 = ssub.s32 1, %s3
  %s6 = scalar_select 0, %s5, %s3
  $region1: #{tpu_custom_call.1} parent=0
    #allocation2 [shape = 'u8[131072]{0}', space=vmem, size = 0x20000, scoped, tag = 'input window, operand 0, single buffered']
    #allocation3 [shape = 's32[2]{0}', space=sflag, size = 0x8, scoped, tag = 'scoped memory for tpu_custom_call.1']
    #allocation4 [shape = 's32[2]{0}', space=sflag, size = 0x8, scoped, tag = 'scoped memory for tpu_custom_call.1']
    #allocation5 [shape = 'u8[131072]{0}', space=vmem, size = 0x20000, scoped, tag = 'input window, operand 1']
    #allocation6 [shape = 's32[2]{0}', space=sflag, size = 0x8, scoped, tag = 'scoped memory for tpu_custom_call.1']
    #allocation7 [shape = 'u8[262144]{0}', space=vmem, size = 0x40000, scoped, tag = 'output window, operand 0']
    %7 = vsyncpa [#allocation3], 0
    %8 = vsyncpa [#allocation6], 0
    %s9 = scalar_lea.sflag [#allocation6], 1
    %10 = vsyncpa %s9, 0
    %11 = vsyncpa [#allocation4], 0
    %s12 = scalar_lea.sflag [#allocation4], 1
    %13 = vsyncpa %s12, 0
    loop: start=0, step=1, limit=4
    $region2: #{tpu_custom_call.1} parent=1 // loop_pre_header
      _
    $region3: #{tpu_custom_call.1} parent=1 // loop_header
      %s15 = sphi 0, %s19
      %p16 = scmp.ge.s32.totalorder %s15, 4
      %s22 = sphi 0, %s41
      %s23 = sphi 0, %s37
      %s24 = sphi 0, %s33
      %s25 = sphi 0, %s22
      %s26 = sphi 0, %s23
      %s27 = sphi 0, %s24
      %s28 = sphi 0, %s25
      %s29 = sphi 0, %s26
      %s30 = sphi 0, %s27
      %s46 = sphi 0, %s48
      %s49 = sphi 0, %s46
      %s50 = sphi 0, %s49
      %s66 = sphi 0, %s50
      %s74 = sphi 0, %s76
      %s77 = sphi 0, %s74
      %s78 = sphi 0, %s77
      %s94 = sphi 0, %s78
      %s102 = sphi 0, %s104
      %s105 = sphi 0, %s102
      %s106 = sphi 0, %s105
      %s122 = sphi 0, %s106
    $region4: #{tpu_custom_call.1} parent=1 // loop_header_branch
      %18 = sbr.rel (%p16) target = $region8
    $region5: #{tpu_custom_call.1} parent=1 // loop_body
      %s20 = ssub.s32 %s15, 1
      %s21 = ssub.s32 %s15, 2
      %s31 = sadd.s32 1, %s24
      %p32 = scmp.ge.s32.totalorder %s31, 1
      %s33 = scalar_select %p32, 0, %s31
      %s34 = sadd.s32 1, %s23
      %s35 = scalar_select %p32, %s34, %s23
      %p36 = scmp.ge.s32.totalorder %s35, 1
      %s37 = scalar_select %p36, 0, %s35
      %s38 = sadd.s32 1, %s22
      %s39 = scalar_select %p36, %s38, %s22
      %p40 = scmp.ge.s32.totalorder %s39, 2
      %s41 = scalar_select %p40, 0, %s39
      %s42 = ssub.s32 %s23, %s37
      %s43 = ssub.s32 %s24, %s33
      %s44 = sor.u32 %s42, %s43
      %p45 = scmp.eq.s32.totalorder %s44, 0
      %s47 = sadd.s32 %s46, 1
      %s48 = scalar_select %p45, %s46, %s47
      %p51 = pneg %p45
      %p52 = scmp.eq.s32.totalorder %s15, 1
      %p53 = por %p51, %p52
      %p54 = scmp.ne.s32.totalorder %s46, %s49
      %p55 = scmp.eq.s32.totalorder %s15, 0
      %p56 = por %p54, %p55
      %p57 = scmp.ne.s32.totalorder %s46, %s49
      %p58 = scmp.eq.s32.totalorder %s20, 1
      %p59 = por %p57, %p58
      %p60 = scmp.ne.s32.totalorder %s49, %s50
      %p61 = scmp.eq.s32.totalorder %s20, 0
      %p62 = por %p60, %p61
      %p63 = scmp.ne.s32.totalorder %s49, %s50
      %p64 = scmp.eq.s32.totalorder %s21, 1
      %p65 = por %p63, %p64
      %p67 = scmp.ne.s32.totalorder %s50, %s66
      %p68 = scmp.eq.s32.totalorder %s21, 0
      %p69 = por %p67, %p68
      %s70 = ssub.s32 %s24, %s33
      %s71 = ssub.s32 %s22, %s41
      %s72 = sor.u32 %s70, %s71
      %p73 = scmp.eq.s32.totalorder %s72, 0
      %s75 = sadd.s32 %s74, 1
      %s76 = scalar_select %p73, %s74, %s75
      %p79 = pneg %p73
      %p80 = scmp.eq.s32.totalorder %s15, 1
      %p81 = por %p79, %p80
      %p82 = scmp.ne.s32.totalorder %s74, %s77
      %p83 = scmp.eq.s32.totalorder %s15, 0
      %p84 = por %p82, %p83
      %p85 = scmp.ne.s32.totalorder %s74, %s77
      %p86 = scmp.eq.s32.totalorder %s20, 1
      %p87 = por %p85, %p86
      %p88 = scmp.ne.s32.totalorder %s77, %s78
      %p89 = scmp.eq.s32.totalorder %s20, 0
      %p90 = por %p88, %p89
      %p91 = scmp.ne.s32.totalorder %s77, %s78
      %p92 = scmp.eq.s32.totalorder %s21, 1
      %p93 = por %p91, %p92
      %p95 = scmp.ne.s32.totalorder %s78, %s94
      %p96 = scmp.eq.s32.totalorder %s21, 0
      %p97 = por %p95, %p96
      %s98 = ssub.s32 %s23, %s37
      %s99 = ssub.s32 %s22, %s41
      %s100 = sor.u32 %s98, %s99
      %p101 = scmp.eq.s32.totalorder %s100, 0
      %s103 = sadd.s32 %s102, 1
      %s104 = scalar_select %p101, %s102, %s103
      %p107 = pneg %p101
      %p108 = scmp.eq.s32.totalorder %s15, 1
      %p109 = por %p107, %p108
      %p110 = scmp.ne.s32.totalorder %s102, %s105
      %p111 = scmp.eq.s32.totalorder %s15, 0
      %p112 = por %p110, %p111
      %p113 = scmp.ne.s32.totalorder %s102, %s105
      %p114 = scmp.eq.s32.totalorder %s20, 1
      %p115 = por %p113, %p114
      %p116 = scmp.ne.s32.totalorder %s105, %s106
      %p117 = scmp.eq.s32.totalorder %s20, 0
      %p118 = por %p116, %p117
      %p119 = scmp.ne.s32.totalorder %s105, %s106
      %p120 = scmp.eq.s32.totalorder %s21, 1
      %p121 = por %p119, %p120
      %p123 = scmp.ne.s32.totalorder %s106, %s122
      %p124 = scmp.eq.s32.totalorder %s21, 0
      %p125 = por %p123, %p124
      %p126 = scmp.le.s32.totalorder 1, %s15
      %p127 = scmp.lt.s32.totalorder %s15, 3
      %p128 = pnand %p126, %p127
      %p129 = pneg %p128
      // Predicated region
      $region9: #{tpu_custom_call.1} parent=5 // pred_check
        _
      $region10: #{tpu_custom_call.1} parent=5 // pred_check_branch
        %131 = sbr.rel (%p128) target = $region12
      $region11: #{tpu_custom_call.1} parent=5 // pred_region
        %s132 = ssub.s32 %s15, 1
        // Predicated region
        $region13: #{tpu_custom_call.1} parent=11 // pred_check
          %p133 = pneg %p62
        $region14: #{tpu_custom_call.1} parent=11 // pred_check_branch
          %135 = sbr.rel (%p133) target = $region16
        $region15: #{tpu_custom_call.1} parent=11 // pred_region
          %s136 = smul.u32 32, %s26
          %s137 = smul.u32 2, %s27
          %s139 = ssub.s32 4096, 4096
          %140 = vsyncadd [#allocation3], %s139
          %s141 = smul.addr %s136, 2
          %s142 = sadd.s32 %s137, %s141
          %s143 = smul.addr %s142, 64
          %s144 = scalar_lea.hbm %s0, %s143
          %s145 = sshll.u32 [#allocation2], 4
          %s146 = int_to_ptr.vmem [resolvable:$true] %s145
          %151 = dma.hbm_to_vmem [thread:$0]  %s144, 4096, %s146, [#allocation3], 128, 128, 8
        $region16: #{tpu_custom_call.1} parent=11 // pred_fallthru
          _
      $region12: #{tpu_custom_call.1} parent=5 // pred_fallthru
        _
      %p152 = scmp.lt.s32.totalorder %s15, 2
      // Predicated region
      $region17: #{tpu_custom_call.1} parent=5 // pred_check
        %p153 = pneg %p152
      $region18: #{tpu_custom_call.1} parent=5 // pred_check_branch
        %155 = sbr.rel (%p153) target = $region20
      $region19: #{tpu_custom_call.1} parent=5 // pred_region
        // Predicated region
        $region21: #{tpu_custom_call.1} parent=19 // pred_check
          %p156 = pneg %p84
        $region22: #{tpu_custom_call.1} parent=19 // pred_check_branch
          %158 = sbr.rel (%p156) target = $region24
        $region23: #{tpu_custom_call.1} parent=19 // pred_region
          %s159 = sand.u32 %s74, 1
          %s160 = scalar_lea.sflag [#allocation6], %s159
          %s161 = sand.u32 %s74, 1
          %s162 = smul.addr %s161, 128
          %s163 = scalar_lea.vmem [#allocation5], %s162
          %s164 = smul.u32 32, %s24
          %s166 = ssub.s32 2048, 2048
          %167 = vsyncadd %s160, %s166
          %s168 = smul.addr %s164, 2
          %s169 = sadd.s32 %s22, %s168
          %s170 = smul.addr %s169, 64
          %s171 = scalar_lea.hbm %s1, %s170
          %s172 = sshll.u32 %s163, 4
          %s173 = int_to_ptr.vmem [resolvable:$true] %s172
          %178 = dma.hbm_to_vmem [thread:$0]  %s171, 2048, %s173, %s160, 128, 64, 4
        $region24: #{tpu_custom_call.1} parent=19 // pred_fallthru
          _
      $region20: #{tpu_custom_call.1} parent=5 // pred_fallthru
        _
      %p179 = scmp.le.s32.totalorder 1, %s15
      %p180 = scmp.lt.s32.totalorder %s15, 3
      %p181 = pnand %p179, %p180
      %p182 = pneg %p181
      // Predicated region
      $region25: #{tpu_custom_call.1} parent=5 // pred_check
        _
      $region26: #{tpu_custom_call.1} parent=5 // pred_check_branch
        %184 = sbr.rel (%p181) target = $region28
      $region27: #{tpu_custom_call.1} parent=5 // pred_region
        %s185 = ssub.s32 %s15, 1
        // Predicated region
        $region29: #{tpu_custom_call.1} parent=27 // pred_check
          %p186 = pneg %p62
        $region30: #{tpu_custom_call.1} parent=27 // pred_check_branch
          %188 = sbr.rel (%p186) target = $region32
        $region31: #{tpu_custom_call.1} parent=27 // pred_region
          %189 = dma.done [#allocation3], 4096
        $region32: #{tpu_custom_call.1} parent=27 // pred_fallthru
          _
        %s190 = sand.u32 %s77, 1
        %s191 = scalar_lea.sflag [#allocation6], %s190
        %s192 = sand.u32 %s77, 1
        %s193 = smul.addr %s192, 128
        %s194 = scalar_lea.vmem [#allocation5], %s193
        // Predicated region
        $region33: #{tpu_custom_call.1} parent=27 // pred_check
          %p195 = pneg %p90
        $region34: #{tpu_custom_call.1} parent=27 // pred_check_branch
          %197 = sbr.rel (%p195) target = $region36
        $region35: #{tpu_custom_call.1} parent=27 // pred_region
          %198 = dma.done %s191, 2048
        $region36: #{tpu_custom_call.1} parent=27 // pred_fallthru
          _
        %p199 = pneg %p62
        %p200 = pneg %p59
        %s201 = sand.u32 %s77, 1
        %s202 = scalar_lea.sflag [#allocation6], %s201
        %s203 = sand.u32 %s77, 1
        %s204 = smul.addr %s203, 128
        %s205 = scalar_lea.vmem [#allocation5], %s204
        %p206 = pneg %p90
        %p207 = pneg %p87
        %p208 = pneg %p118
        %p209 = pneg %p115
        %s210 = sand.u32 %s105, 1
        %s211 = scalar_lea.sflag [#allocation4], %s210
        %s212 = sand.u32 %s105, 1
        %s213 = smul.addr %s212, 256
        %s214 = scalar_lea.vmem [#allocation7], %s213
        %s215 = smul.u32 32, %s26
        %s216 = smul.u32 2, %s27
        %s217 = smul.u32 32, %s27
        %s218 = smul.u32 32, %s26
        %v220 = vld [vmem:[#allocation2] sm:$0xff]
        %v221 = vld [vmem:[#allocation2 + $0x8] sm:$0xff]
        %v222 = vld [vmem:[#allocation2 + $0x10] sm:$0xff]
        %v223 = vld [vmem:[#allocation2 + $0x18] sm:$0xff]
        %v224 = vld [vmem:[#allocation2 + $0x20] sm:$0xff]
        %v225 = vld [vmem:[#allocation2 + $0x28] sm:$0xff]
        %v226 = vld [vmem:[#allocation2 + $0x30] sm:$0xff]
        %v227 = vld [vmem:[#allocation2 + $0x38] sm:$0xff]
        %v228 = vld [vmem:[#allocation2 + $0x40] sm:$0xff]
        %v229 = vld [vmem:[#allocation2 + $0x48] sm:$0xff]
        %v230 = vld [vmem:[#allocation2 + $0x50] sm:$0xff]
        %v231 = vld [vmem:[#allocation2 + $0x58] sm:$0xff]
        %v232 = vld [vmem:[#allocation2 + $0x60] sm:$0xff]
        %v233 = vld [vmem:[#allocation2 + $0x68] sm:$0xff]
        %v234 = vld [vmem:[#allocation2 + $0x70] sm:$0xff]
        %v235 = vld [vmem:[#allocation2 + $0x78] sm:$0xff]
        %v236 = vld [vmem:[#allocation2 + $0x80] sm:$0xff]
        %v237 = vld [vmem:[#allocation2 + $0x88] sm:$0xff]
        %v238 = vld [vmem:[#allocation2 + $0x90] sm:$0xff]
        %v239 = vld [vmem:[#allocation2 + $0x98] sm:$0xff]
        %v240 = vld [vmem:[#allocation2 + $0xa0] sm:$0xff]
        %v241 = vld [vmem:[#allocation2 + $0xa8] sm:$0xff]
        %v242 = vld [vmem:[#allocation2 + $0xb0] sm:$0xff]
        %v243 = vld [vmem:[#allocation2 + $0xb8] sm:$0xff]
        %v244 = vld [vmem:[#allocation2 + $0xc0] sm:$0xff]
        %v245 = vld [vmem:[#allocation2 + $0xc8] sm:$0xff]
        %v246 = vld [vmem:[#allocation2 + $0xd0] sm:$0xff]
        %v247 = vld [vmem:[#allocation2 + $0xd8] sm:$0xff]
        %v248 = vld [vmem:[#allocation2 + $0xe0] sm:$0xff]
        %v249 = vld [vmem:[#allocation2 + $0xe8] sm:$0xff]
        %v250 = vld [vmem:[#allocation2 + $0xf0] sm:$0xff]
        %v251 = vld [vmem:[#allocation2 + $0xf8] sm:$0xff]
        %v252 = vld [vmem:[%s194] sm:$0xf]
        %v253 = vld [vmem:[%s194 + $0x4] sm:$0xf]
        %v254 = vld [vmem:[%s194 + $0x8] sm:$0xf]
        %v255 = vld [vmem:[%s194 + $0xc] sm:$0xf]
        %v256 = vld [vmem:[%s194 + $0x10] sm:$0xf]
        %v257 = vld [vmem:[%s194 + $0x14] sm:$0xf]
        %v258 = vld [vmem:[%s194 + $0x18] sm:$0xf]
        %v259 = vld [vmem:[%s194 + $0x1c] sm:$0xf]
        %v260 = vld [vmem:[%s194 + $0x20] sm:$0xf]
        %v261 = vld [vmem:[%s194 + $0x24] sm:$0xf]
        %v262 = vld [vmem:[%s194 + $0x28] sm:$0xf]
        %v263 = vld [vmem:[%s194 + $0x2c] sm:$0xf]
        %v264 = vld [vmem:[%s194 + $0x30] sm:$0xf]
        %v265 = vld [vmem:[%s194 + $0x34] sm:$0xf]
        %v266 = vld [vmem:[%s194 + $0x38] sm:$0xf]
        %v267 = vld [vmem:[%s194 + $0x3c] sm:$0xf]
        %v268 = vld [vmem:[%s194 + $0x40] sm:$0xf]
        %v269 = vld [vmem:[%s194 + $0x44] sm:$0xf]
        %v270 = vld [vmem:[%s194 + $0x48] sm:$0xf]
        %v271 = vld [vmem:[%s194 + $0x4c] sm:$0xf]
        %v272 = vld [vmem:[%s194 + $0x50] sm:$0xf]
        %v273 = vld [vmem:[%s194 + $0x54] sm:$0xf]
        %v274 = vld [vmem:[%s194 + $0x58] sm:$0xf]
        %v275 = vld [vmem:[%s194 + $0x5c] sm:$0xf]
        %v276 = vld [vmem:[%s194 + $0x60] sm:$0xf]
        %v277 = vld [vmem:[%s194 + $0x64] sm:$0xf]
        %v278 = vld [vmem:[%s194 + $0x68] sm:$0xf]
        %v279 = vld [vmem:[%s194 + $0x6c] sm:$0xf]
        %v280 = vld [vmem:[%s194 + $0x70] sm:$0xf]
        %v281 = vld [vmem:[%s194 + $0x74] sm:$0xf]
        %v282 = vld [vmem:[%s194 + $0x78] sm:$0xf]
        %v283 = vld [vmem:[%s194 + $0x7c] sm:$0xf]
        %v316 = vunpack.c.l.b16 %v220
        %v317 = vunpack.c.h.b16 %v220
        %v318 = vunpack.c.l.b16 %v221
        %v319 = vunpack.c.h.b16 %v221
        %v320 = vunpack.c.l.b16 %v222
        %v321 = vunpack.c.h.b16 %v222
        %v322 = vunpack.c.l.b16 %v223
        %v323 = vunpack.c.h.b16 %v223
        %v324 = vunpack.c.l.b16 %v224
        %v325 = vunpack.c.h.b16 %v224
        %v326 = vunpack.c.l.b16 %v225
        %v327 = vunpack.c.h.b16 %v225
        %v328 = vunpack.c.l.b16 %v226
        %v329 = vunpack.c.h.b16 %v226
        %v330 = vunpack.c.l.b16 %v227
        %v331 = vunpack.c.h.b16 %v227
        %v332 = vunpack.c.l.b16 %v228
        %v333 = vunpack.c.h.b16 %v228
        %v334 = vunpack.c.l.b16 %v229
        %v335 = vunpack.c.h.b16 %v229
        %v336 = vunpack.c.l.b16 %v230
        %v337 = vunpack.c.h.b16 %v230
        %v338 = vunpack.c.l.b16 %v231
        %v339 = vunpack.c.h.b16 %v231
        %v340 = vunpack.c.l.b16 %v232
        %v341 = vunpack.c.h.b16 %v232
        %v342 = vunpack.c.l.b16 %v233
        %v343 = vunpack.c.h.b16 %v233
        %v344 = vunpack.c.l.b16 %v234
        %v345 = vunpack.c.h.b16 %v234
        %v346 = vunpack.c.l.b16 %v235
        %v347 = vunpack.c.h.b16 %v235
        %v348 = vunpack.c.l.b16 %v236
        %v349 = vunpack.c.h.b16 %v236
        %v350 = vunpack.c.l.b16 %v237
        %v351 = vunpack.c.h.b16 %v237
        %v352 = vunpack.c.l.b16 %v238
        %v353 = vunpack.c.h.b16 %v238
        %v354 = vunpack.c.l.b16 %v239
        %v355 = vunpack.c.h.b16 %v239
        %v356 = vunpack.c.l.b16 %v240
        %v357 = vunpack.c.h.b16 %v240
        %v358 = vunpack.c.l.b16 %v241
        %v359 = vunpack.c.h.b16 %v241
        %v360 = vunpack.c.l.b16 %v242
        %v361 = vunpack.c.h.b16 %v242
        %v362 = vunpack.c.l.b16 %v243
        %v363 = vunpack.c.h.b16 %v243
        %v364 = vunpack.c.l.b16 %v244
        %v365 = vunpack.c.h.b16 %v244
        %v366 = vunpack.c.l.b16 %v245
        %v367 = vunpack.c.h.b16 %v245
        %v368 = vunpack.c.l.b16 %v246
        %v369 = vunpack.c.h.b16 %v246
        %v370 = vunpack.c.l.b16 %v247
        %v371 = vunpack.c.h.b16 %v247
        %v372 = vunpack.c.l.b16 %v248
        %v373 = vunpack.c.h.b16 %v248
        %v374 = vunpack.c.l.b16 %v249
        %v375 = vunpack.c.h.b16 %v249
        %v376 = vunpack.c.l.b16 %v250
        %v377 = vunpack.c.h.b16 %v250
        %v378 = vunpack.c.l.b16 %v251
        %v379 = vunpack.c.h.b16 %v251
        %v380 = vpack.c.b16 %v318, %v316
        %v381 = vpack.c.b16 %v319, %v317
        %v382 = vpack.c.b16 %v322, %v320
        %v383 = vpack.c.b16 %v323, %v321
        %v384 = vpack.c.b16 %v326, %v324
        %v385 = vpack.c.b16 %v327, %v325
        %v386 = vpack.c.b16 %v330, %v328
        %v387 = vpack.c.b16 %v331, %v329
        %v388 = vpack.c.b16 %v334, %v332
        %v389 = vpack.c.b16 %v335, %v333
        %v390 = vpack.c.b16 %v338, %v336
        %v391 = vpack.c.b16 %v339, %v337
        %v392 = vpack.c.b16 %v342, %v340
        %v393 = vpack.c.b16 %v343, %v341
        %v394 = vpack.c.b16 %v346, %v344
        %v395 = vpack.c.b16 %v347, %v345
        %v396 = vpack.c.b16 %v350, %v348
        %v397 = vpack.c.b16 %v351, %v349
        %v398 = vpack.c.b16 %v354, %v352
        %v399 = vpack.c.b16 %v355, %v353
        %v400 = vpack.c.b16 %v358, %v356
        %v401 = vpack.c.b16 %v359, %v357
        %v402 = vpack.c.b16 %v362, %v360
        %v403 = vpack.c.b16 %v363, %v361
        %v404 = vpack.c.b16 %v366, %v364
        %v405 = vpack.c.b16 %v367, %v365
        %v406 = vpack.c.b16 %v370, %v368
        %v407 = vpack.c.b16 %v371, %v369
        %v408 = vpack.c.b16 %v374, %v372
        %v409 = vpack.c.b16 %v375, %v373
        %v410 = vpack.c.b16 %v378, %v376
        %v411 = vpack.c.b16 %v379, %v377
        %v476 = vunpack.c.l.b16 %v252
        %v477 = vunpack.c.l.b16 %v253
        %v478 = vunpack.c.l.b16 %v254
        %v479 = vunpack.c.l.b16 %v255
        %v480 = vunpack.c.l.b16 %v256
        %v481 = vunpack.c.l.b16 %v257
        %v482 = vunpack.c.l.b16 %v258
        %v483 = vunpack.c.l.b16 %v259
        %v484 = vunpack.c.l.b16 %v260
        %v485 = vunpack.c.l.b16 %v261
        %v486 = vunpack.c.l.b16 %v262
        %v487 = vunpack.c.l.b16 %v263
        %v488 = vunpack.c.l.b16 %v264
        %v489 = vunpack.c.l.b16 %v265
        %v490 = vunpack.c.l.b16 %v266
        %v491 = vunpack.c.l.b16 %v267
        %v492 = vunpack.c.l.b16 %v268
        %v493 = vunpack.c.l.b16 %v269
        %v494 = vunpack.c.l.b16 %v270
        %v495 = vunpack.c.l.b16 %v271
        %v496 = vunpack.c.l.b16 %v272
        %v497 = vunpack.c.l.b16 %v273
        %v498 = vunpack.c.l.b16 %v274
        %v499 = vunpack.c.l.b16 %v275
        %v500 = vunpack.c.l.b16 %v276
        %v501 = vunpack.c.l.b16 %v277
        %v502 = vunpack.c.l.b16 %v278
        %v503 = vunpack.c.l.b16 %v279
        %v504 = vunpack.c.l.b16 %v280
        %v505 = vunpack.c.l.b16 %v281
        %v506 = vunpack.c.l.b16 %v282
        %v507 = vunpack.c.l.b16 %v283
        %v508 = vpack.c.b16 %v477, %v476
        %v509 = vpack.c.b16 %v479, %v478
        %v510 = vpack.c.b16 %v481, %v480
        %v511 = vpack.c.b16 %v483, %v482
        %v512 = vpack.c.b16 %v485, %v484
        %v513 = vpack.c.b16 %v487, %v486
        %v514 = vpack.c.b16 %v489, %v488
        %v515 = vpack.c.b16 %v491, %v490
        %v516 = vpack.c.b16 %v493, %v492
        %v517 = vpack.c.b16 %v495, %v494
        %v518 = vpack.c.b16 %v497, %v496
        %v519 = vpack.c.b16 %v499, %v498
        %v520 = vpack.c.b16 %v501, %v500
        %v521 = vpack.c.b16 %v503, %v502
        %v522 = vpack.c.b16 %v505, %v504
        %v523 = vpack.c.b16 %v507, %v506
        %540 = vmatprep.subr.bf16.mxu0 0
        %541 = vmatpush1.bf16.msra.mxu0 %v515
        %542 = vmatprep.subr.bf16.mxu0 0
        %543 = vmatpush1.bf16.msra.mxu0 %v514
        %544 = vmatprep.subr.bf16.mxu0 0
        %545 = vmatpush1.bf16.msra.mxu0 %v513
        %546 = vmatprep.subr.bf16.mxu0 0
        %547 = vmatpush1.bf16.msra.mxu0 %v512
        %548 = vmatprep.subr.bf16.mxu0 0
        %549 = vmatpush1.bf16.msra.mxu0 %v511
        %550 = vmatprep.subr.bf16.mxu0 0
        %551 = vmatpush1.bf16.msra.mxu0 %v510
        %552 = vmatprep.subr.bf16.mxu0 0
        %553 = vmatpush1.bf16.msra.mxu0 %v509
        %554 = vmatprep.subr.bf16.mxu0 0
        %555 = vmatpush1.bf16.msra.mxu0 %v508
        %556 = vmatprep.subr.bf16.mxu0 0
        %557 = vmatpush2.bf16.msra.mxu0 %v523
        %558 = vmatprep.subr.bf16.mxu0 0
        %559 = vmatpush2.bf16.msra.mxu0 %v522
        %560 = vmatprep.subr.bf16.mxu0 0
        %561 = vmatpush2.bf16.msra.mxu0 %v521
        %562 = vmatprep.subr.bf16.mxu0 0
        %563 = vmatpush2.bf16.msra.mxu0 %v520
        %564 = vmatprep.subr.bf16.mxu0 0
        %565 = vmatpush2.bf16.msra.mxu0 %v519
        %566 = vmatprep.subr.bf16.mxu0 0
        %567 = vmatpush2.bf16.msra.mxu0 %v518
        %568 = vmatprep.subr.bf16.mxu0 0
        %569 = vmatpush2.bf16.msra.mxu0 %v517
        %570 = vmatprep.subr.bf16.mxu0 0
        %571 = vmatpush2.bf16.msra.mxu0 %v516
        %572 = vmatprep.mubr.bf16.mxu0 %v381
        %573 = vmatmul.mubr.bf16.gmra.mxu0 %v380
        %v574 = vpop.f32.mrf.mxu0
        %v575 = vadd.f32 0.0, %v574
        %v576 = vpop.f32.mrf.mxu0
        %v577 = vpop.f32.mrf.mxu0
        %v578 = vadd.f32 0.0, %v577
        %v579 = vpop.f32.mrf.mxu0
        %580 = vmatprep.mubr.bf16.mxu0 %v383
        %581 = vmatmul.mubr.bf16.gmra.mxu0 %v382
        %v582 = vpop.f32.mrf.mxu0
        %v583 = vadd.f32 0.0, %v582
        %v584 = vpop.f32.mrf.mxu0
        %v585 = vpop.f32.mrf.mxu0
        %v586 = vadd.f32 0.0, %v585
        %v587 = vpop.f32.mrf.mxu0
        %588 = vmatprep.mubr.bf16.mxu0 %v385
        %589 = vmatmul.mubr.bf16.gmra.mxu0 %v384
        %v590 = vpop.f32.mrf.mxu0
        %v591 = vadd.f32 0.0, %v590
        %v592 = vpop.f32.mrf.mxu0
        %v593 = vpop.f32.mrf.mxu0
        %v594 = vadd.f32 0.0, %v593
        %v595 = vpop.f32.mrf.mxu0
        %596 = vmatprep.mubr.bf16.mxu0 %v387
        %597 = vmatmul.mubr.bf16.gmra.mxu0 %v386
        %v598 = vpop.f32.mrf.mxu0
        %v599 = vadd.f32 0.0, %v598
        %v600 = vpop.f32.mrf.mxu0
        %v601 = vpop.f32.mrf.mxu0
        %v602 = vadd.f32 0.0, %v601
        %v603 = vpop.f32.mrf.mxu0
        %604 = vmatprep.mubr.bf16.mxu0 %v389
        %605 = vmatmul.mubr.bf16.gmra.mxu0 %v388
        %v606 = vpop.f32.mrf.mxu0
        %v607 = vadd.f32 0.0, %v606
        %v608 = vpop.f32.mrf.mxu0
        %v609 = vpop.f32.mrf.mxu0
        %v610 = vadd.f32 0.0, %v609
        %v611 = vpop.f32.mrf.mxu0
        %612 = vmatprep.mubr.bf16.mxu0 %v391
        %613 = vmatmul.mubr.bf16.gmra.mxu0 %v390
        %v614 = vpop.f32.mrf.mxu0
        %v615 = vadd.f32 0.0, %v614
        %v616 = vpop.f32.mrf.mxu0
        %v617 = vpop.f32.mrf.mxu0
        %v618 = vadd.f32 0.0, %v617
        %v619 = vpop.f32.mrf.mxu0
        %620 = vmatprep.mubr.bf16.mxu0 %v393
        %621 = vmatmul.mubr.bf16.gmra.mxu0 %v392
        %v622 = vpop.f32.mrf.mxu0
        %v623 = vadd.f32 0.0, %v622
        %v624 = vpop.f32.mrf.mxu0
        %v625 = vpop.f32.mrf.mxu0
        %v626 = vadd.f32 0.0, %v625
        %v627 = vpop.f32.mrf.mxu0
        %628 = vmatprep.mubr.bf16.mxu0 %v395
        %629 = vmatmul.mubr.bf16.gmra.mxu0 %v394
        %v630 = vpop.f32.mrf.mxu0
        %v631 = vadd.f32 0.0, %v630
        %v632 = vpop.f32.mrf.mxu0
        %v633 = vpop.f32.mrf.mxu0
        %v634 = vadd.f32 0.0, %v633
        %v635 = vpop.f32.mrf.mxu0
        %636 = vmatprep.mubr.bf16.mxu0 %v397
        %637 = vmatmul.mubr.bf16.gmra.mxu0 %v396
        %v638 = vpop.f32.mrf.mxu0
        %v639 = vadd.f32 0.0, %v638
        %v640 = vpop.f32.mrf.mxu0
        %v641 = vpop.f32.mrf.mxu0
        %v642 = vadd.f32 0.0, %v641
        %v643 = vpop.f32.mrf.mxu0
        %644 = vmatprep.mubr.bf16.mxu0 %v399
        %645 = vmatmul.mubr.bf16.gmra.mxu0 %v398
        %v646 = vpop.f32.mrf.mxu0
        %v647 = vadd.f32 0.0, %v646
        %v648 = vpop.f32.mrf.mxu0
        %v649 = vpop.f32.mrf.mxu0
        %v650 = vadd.f32 0.0, %v649
        %v651 = vpop.f32.mrf.mxu0
        %652 = vmatprep.mubr.bf16.mxu0 %v401
        %653 = vmatmul.mubr.bf16.gmra.mxu0 %v400
        %v654 = vpop.f32.mrf.mxu0
        %v655 = vadd.f32 0.0, %v654
        %v656 = vpop.f32.mrf.mxu0
        %v657 = vpop.f32.mrf.mxu0
        %v658 = vadd.f32 0.0, %v657
        %v659 = vpop.f32.mrf.mxu0
        %660 = vmatprep.mubr.bf16.mxu0 %v403
        %661 = vmatmul.mubr.bf16.gmra.mxu0 %v402
        %v662 = vpop.f32.mrf.mxu0
        %v663 = vadd.f32 0.0, %v662
        %v664 = vpop.f32.mrf.mxu0
        %v665 = vpop.f32.mrf.mxu0
        %v666 = vadd.f32 0.0, %v665
        %v667 = vpop.f32.mrf.mxu0
        %668 = vmatprep.mubr.bf16.mxu0 %v405
        %669 = vmatmul.mubr.bf16.gmra.mxu0 %v404
        %v670 = vpop.f32.mrf.mxu0
        %v671 = vadd.f32 0.0, %v670
        %v672 = vpop.f32.mrf.mxu0
        %v673 = vpop.f32.mrf.mxu0
        %v674 = vadd.f32 0.0, %v673
        %v675 = vpop.f32.mrf.mxu0
        %676 = vmatprep.mubr.bf16.mxu0 %v407
        %677 = vmatmul.mubr.bf16.gmra.mxu0 %v406
        %v678 = vpop.f32.mrf.mxu0
        %v679 = vadd.f32 0.0, %v678
        %v680 = vpop.f32.mrf.mxu0
        %v681 = vpop.f32.mrf.mxu0
        %v682 = vadd.f32 0.0, %v681
        %v683 = vpop.f32.mrf.mxu0
        %684 = vmatprep.mubr.bf16.mxu0 %v409
        %685 = vmatmul.mubr.bf16.gmra.mxu0 %v408
        %v686 = vpop.f32.mrf.mxu0
        %v687 = vadd.f32 0.0, %v686
        %v688 = vpop.f32.mrf.mxu0
        %v689 = vpop.f32.mrf.mxu0
        %v690 = vadd.f32 0.0, %v689
        %v691 = vpop.f32.mrf.mxu0
        %692 = vmatprep.mubr.bf16.mxu0 %v411
        %693 = vmatmul.mubr.bf16.gmra.mxu0 %v410
        %v694 = vpop.f32.mrf.mxu0
        %v695 = vadd.f32 0.0, %v694
        %v696 = vpop.f32.mrf.mxu0
        %v697 = vpop.f32.mrf.mxu0
        %v698 = vadd.f32 0.0, %v697
        %v699 = vpop.f32.mrf.mxu0
        %700 = vdwg.mxu0
        %701 = vst [vmem:[%s214] sm:$0xff] %v575
        %702 = vst [vmem:[%s214 + $0x8] sm:$0xff] %v578
        %703 = vst [vmem:[%s214 + $0x10] sm:$0xff] %v583
        %704 = vst [vmem:[%s214 + $0x18] sm:$0xff] %v586
        %705 = vst [vmem:[%s214 + $0x20] sm:$0xff] %v591
        %706 = vst [vmem:[%s214 + $0x28] sm:$0xff] %v594
        %707 = vst [vmem:[%s214 + $0x30] sm:$0xff] %v599
        %708 = vst [vmem:[%s214 + $0x38] sm:$0xff] %v602
        %709 = vst [vmem:[%s214 + $0x40] sm:$0xff] %v607
        %710 = vst [vmem:[%s214 + $0x48] sm:$0xff] %v610
        %711 = vst [vmem:[%s214 + $0x50] sm:$0xff] %v615
        %712 = vst [vmem:[%s214 + $0x58] sm:$0xff] %v618
        %713 = vst [vmem:[%s214 + $0x60] sm:$0xff] %v623
        %714 = vst [vmem:[%s214 + $0x68] sm:$0xff] %v626
        %715 = vst [vmem:[%s214 + $0x70] sm:$0xff] %v631
        %716 = vst [vmem:[%s214 + $0x78] sm:$0xff] %v634
        %717 = vst [vmem:[%s214 + $0x80] sm:$0xff] %v639
        %718 = vst [vmem:[%s214 + $0x88] sm:$0xff] %v642
        %719 = vst [vmem:[%s214 + $0x90] sm:$0xff] %v647
        %720 = vst [vmem:[%s214 + $0x98] sm:$0xff] %v650
        %721 = vst [vmem:[%s214 + $0xa0] sm:$0xff] %v655
        %722 = vst [vmem:[%s214 + $0xa8] sm:$0xff] %v658
        %723 = vst [vmem:[%s214 + $0xb0] sm:$0xff] %v663
        %724 = vst [vmem:[%s214 + $0xb8] sm:$0xff] %v666
        %725 = vst [vmem:[%s214 + $0xc0] sm:$0xff] %v671
        %726 = vst [vmem:[%s214 + $0xc8] sm:$0xff] %v674
        %727 = vst [vmem:[%s214 + $0xd0] sm:$0xff] %v679
        %728 = vst [vmem:[%s214 + $0xd8] sm:$0xff] %v682
        %729 = vst [vmem:[%s214 + $0xe0] sm:$0xff] %v687
        %730 = vst [vmem:[%s214 + $0xe8] sm:$0xff] %v690
        %731 = vst [vmem:[%s214 + $0xf0] sm:$0xff] %v695
        %732 = vst [vmem:[%s214 + $0xf8] sm:$0xff] %v698
        %s733 = sand.u32 %s105, 1
        %s734 = scalar_lea.sflag [#allocation4], %s733
        %s735 = sand.u32 %s105, 1
        %s736 = smul.addr %s735, 256
        %s737 = scalar_lea.vmem [#allocation7], %s736
        // Predicated region
        $region37: #{tpu_custom_call.1} parent=27 // pred_check
          %p738 = pneg %p115
        $region38: #{tpu_custom_call.1} parent=27 // pred_check_branch
          %740 = sbr.rel (%p738) target = $region40
        $region39: #{tpu_custom_call.1} parent=27 // pred_region
          %s741 = smul.u32 32, %s26
          %s743 = ssub.s32 4096, 4096
          %744 = vsyncadd %s734, %s743
          %s745 = smul.addr %s741, 2
          %s746 = sadd.s32 %s25, %s745
          %s747 = smul.addr %s746, 128
          %s748 = scalar_lea.hbm %s2, %s747
          %s749 = sshll.u32 %s737, 4
          %s750 = int_to_ptr.vmem [resolvable:$true] %s749
          %755 = dma.vmem_to_hbm [thread:$0]  %s750, 4096, %s748, %s734, 128, 256, 8
        $region40: #{tpu_custom_call.1} parent=27 // pred_fallthru
          _
      $region28: #{tpu_custom_call.1} parent=5 // pred_fallthru
        _
      %p756 = scmp.le.s32.totalorder 2, %s15
      // Predicated region
      $region41: #{tpu_custom_call.1} parent=5 // pred_check
        %p757 = pneg %p756
      $region42: #{tpu_custom_call.1} parent=5 // pred_check_branch
        %759 = sbr.rel (%p757) target = $region44
      $region43: #{tpu_custom_call.1} parent=5 // pred_region
        %s760 = ssub.s32 %s15, 2
        // Predicated region
        $region45: #{tpu_custom_call.1} parent=43 // pred_check
          %p761 = pneg %p121
        $region46: #{tpu_custom_call.1} parent=43 // pred_check_branch
          %763 = sbr.rel (%p761) target = $region48
        $region47: #{tpu_custom_call.1} parent=43 // pred_region
          %s764 = sand.u32 %s106, 1
          %s765 = scalar_lea.sflag [#allocation4], %s764
          %s766 = sand.u32 %s106, 1
          %s767 = smul.addr %s766, 256
          %s768 = scalar_lea.vmem [#allocation7], %s767
          %769 = dma.done %s765, 4096
        $region48: #{tpu_custom_call.1} parent=43 // pred_fallthru
          _
      $region44: #{tpu_custom_call.1} parent=5 // pred_fallthru
        _
    $region6: #{tpu_custom_call.1} parent=1 // loop_footer
      %s19 = sadd.s32 1, %s15
    $region7: #{tpu_custom_call.1} parent=1 // loop_footer_branch
      %14 = sbr.rel target = $region3
    $region8: #{tpu_custom_call.1} parent=1 // loop_exit
      _
    %770 = vsyncpa [#allocation3], 1
    %s771 = scalar_lea.sflag [#allocation3], 1
    %772 = vsyncpa %s771, 1
    %773 = vsyncpa [#allocation6], 1
    %s774 = scalar_lea.sflag [#allocation6], 1
    %775 = vsyncpa %s774, 1
    %776 = vsyncpa [#allocation4], 1
    %s777 = scalar_lea.sflag [#allocation4], 1
    %778 = vsyncpa %s777, 1

</llo_original>
